<compile_context>
chip_gen: v6e
topology: v6e:2x2x1
jax: 0.10.0
libtpu: 0.0.40
codegen_flags: <defaults>
</compile_context>

<pallas_src>
import jax
import jax.numpy as jnp
from jax.experimental import pallas as pl
from jax.experimental.pallas import tpu as pltpu

HIDDEN_SIZE = 25
INPUT_SIZE = 2
OUTPUT_SIZE = 2

LANE = 128  # TPU lane width


def _round_up(x, m):
    return ((x + m - 1) // m) * m


def residual_block_kernel(xT_ref, w1T_ref, b1T_ref, w2T_ref, b2T_ref, oT_ref):
    # Lane-dense layout: batch on the lane (last) axis.
    #   xT : (Din, TB)    w1T: (H, Din)    b1T: (H, 1)
    #   w2T: (Dout, H)    b2T: (Dout, 1)   oT : (Dout, TB)
    xT = xT_ref[...].astype(jnp.float32)            # (Din, TB)
    txT = jnp.tanh(xT)                              # (Din, TB)   -> EUP

    # --- Layer 1: degenerate K=Din=2 contraction as broadcast FMAs on the VPU ---
    # h[j, :] = b1[j] + sum_d w1[d, j] * tanh(x[d, :])
    w1T = w1T_ref[...]                              # (H, Din)
    h = jnp.broadcast_to(b1T_ref[...], (w1T.shape[0], xT.shape[1]))  # (H, TB)
    for d in range(xT.shape[0]):                    # Din == 2, static unroll
        h = h + w1T[:, d:d + 1] * txT[d:d + 1, :]   # (H,1)*(1,TB) broadcast FMA

    # --- Layer 2: (Dout, H) @ (H, TB) on the MXU, lane-dense N ---
    y = jnp.dot(w2T_ref[...], jnp.tanh(h),
                preferred_element_type=jnp.float32)  # (Dout, TB)
    y = y + b2T_ref[...]                             # (Dout, 1) broadcast

    # Residual add with the PRE-activation input, lane-dense store.
    oT_ref[...] = (xT + y).astype(oT_ref.dtype)


def residual_block(x, w1, b1, w2, b2, *, block_batch=2048):
    """x: (B, Din) f32; w1: (Din, H); b1: (1, H); w2: (H, Dout); b2: (1, Dout)."""
    B, Din = x.shape
    H = w1.shape[1]
    Dout = w2.shape[1]
    assert Din == Dout, "residual add requires input_size == output_size"

    # Batch tile on the lane axis: multiple of 128 lanes, capped by padded batch.
    tb = min(_round_up(block_batch, LANE), _round_up(B, LANE))
    B_pad = _round_up(B, tb)
    num_tiles = B_pad // tb

    # Wrapper-side re-layout (layout plumbing, not compute):
    xT = jnp.transpose(x)                           # (Din, B)
    if B_pad != B:
        xT = jnp.pad(xT, ((0, 0), (0, B_pad - B)))  # zero-pad extra lanes
    w1T = jnp.transpose(w1)                         # (H, Din)
    b1T = jnp.reshape(b1, (H, 1))
    w2T = jnp.transpose(w2)                         # (Dout, H)
    b2T = jnp.reshape(b2, (Dout, 1))

    cost = pl.CostEstimate(
        flops=2 * B * (Din * H + H * Dout),
        transcendentals=B * (Din + H),              # tanh count per sample = 27
        bytes_accessed=4 * B * (Din + Dout) + 4 * (Din * H + H + H * Dout + Dout),
    )

    oT = pl.pallas_call(
        residual_block_kernel,
        out_shape=jax.ShapeDtypeStruct((Dout, B_pad), x.dtype),
        grid_spec=pl.GridSpec(
            grid=(num_tiles,),
            in_specs=[
                pl.BlockSpec((Din, tb), lambda i: (0, i)),   # streamed x tile
                pl.BlockSpec((H, Din), lambda i: (0, 0)),    # weights: VMEM-resident
                pl.BlockSpec((H, 1), lambda i: (0, 0)),
                pl.BlockSpec((Dout, H), lambda i: (0, 0)),
                pl.BlockSpec((Dout, 1), lambda i: (0, 0)),
            ],
            out_specs=pl.BlockSpec((Dout, tb), lambda i: (0, i)),
        ),
        compiler_params=pltpu.CompilerParams(
            dimension_semantics=("parallel",)),     # v7x megacore; no-op on v5e/v6e
        cost_estimate=cost,
    )(xT, w1T, b1T, w2T, b2T)

    # Back to the (B, Dout) row-major layout of the PyTorch module.
    return jnp.transpose(oT[:, :B])


def reference(x, w1, b1, w2, b2):
    h = jnp.tanh(x) @ w1 + b1
    y = jnp.tanh(h) @ w2 + b2
    return x + y


if __name__ == "__main__":
    key = jax.random.PRNGKey(0)
    k_x, k_w1, k_b1, k_w2, k_b2 = jax.random.split(key, 5)

    # Small batch; deliberately not a multiple of 128 so padding + a multi-tile
    # grid (3 tiles of 128 lanes) are exercised.
    B = 300
    x = jax.random.normal(k_x, (B, INPUT_SIZE), dtype=jnp.float32)

    # Deterministic parameter init (PyTorch-Linear-like uniform bounds),
    # stored already transposed as [in_features, out_features].
    bound1 = 1.0 / (INPUT_SIZE ** 0.5)
    w1 = jax.random.uniform(k_w1, (INPUT_SIZE, HIDDEN_SIZE),
                            minval=-bound1, maxval=bound1, dtype=jnp.float32)
    b1 = jax.random.uniform(k_b1, (1, HIDDEN_SIZE),
                            minval=-bound1, maxval=bound1, dtype=jnp.float32)

    bound2 = 1.0 / (HIDDEN_SIZE ** 0.5)
    w2 = jax.random.uniform(k_w2, (HIDDEN_SIZE, OUTPUT_SIZE),
                            minval=-bound2, maxval=bound2, dtype=jnp.float32)
    b2 = jax.random.uniform(k_b2, (1, OUTPUT_SIZE),
                            minval=-bound2, maxval=bound2, dtype=jnp.float32)

    out = residual_block(x, w1, b1, w2, b2, block_batch=128)
    out = jax.block_until_ready(out)

    ref = reference(x, w1, b1, w2, b2)
    assert out.shape == (B, OUTPUT_SIZE)
    assert jnp.allclose(out, ref, atol=1e-5, rtol=1e-5), "mismatch vs reference"

    print("KERNEL_OK")
</pallas_src>

<mosaic_0001>
module attributes {stable_mosaic.version = 11 : i64} {
  func.func @residual_block_kernel(%arg0: i32, %arg1: memref<2x128xf32, #tpu.memory_space<vmem>>, %arg2: memref<25x2xf32, #tpu.memory_space<vmem>>, %arg3: memref<25x1xf32, #tpu.memory_space<vmem>>, %arg4: memref<2x25xf32, #tpu.memory_space<vmem>>, %arg5: memref<2x1xf32, #tpu.memory_space<vmem>>, %arg6: memref<2x128xf32, #tpu.memory_space<vmem>>) attributes {dimension_semantics = [#tpu.dimension_semantics<parallel>], iteration_bounds = array<i64: 3>, scalar_prefetch = 0 : i64, scratch_operands = 0 : i64, tpu.core_type = #tpu.core_type<tc>, window_params = [{transform_indices = @transform_0, window_bounds = array<i64: 2, 128>}, {pipeline_mode = #tpu.pipeline_mode<synchronous>, transform_indices = @transform_1, window_bounds = array<i64: 25, 2>}, {pipeline_mode = #tpu.pipeline_mode<synchronous>, transform_indices = @transform_2, window_bounds = array<i64: 25, 1>}, {pipeline_mode = #tpu.pipeline_mode<synchronous>, transform_indices = @transform_3, window_bounds = array<i64: 2, 25>}, {pipeline_mode = #tpu.pipeline_mode<synchronous>, transform_indices = @transform_4, window_bounds = array<i64: 2, 1>}, {transform_indices = @transform_5, window_bounds = array<i64: 2, 128>}]} {
    %c0 = arith.constant 0 : index
    %c0_0 = arith.constant 0 : index
    %0 = vector.load %arg1[%c0, %c0_0] : memref<2x128xf32, #tpu.memory_space<vmem>>, vector<2x128xf32>
    %1 = math.tanh %0 : vector<2x128xf32>
    %c0_1 = arith.constant 0 : index
    %c0_2 = arith.constant 0 : index
    %2 = vector.load %arg2[%c0_1, %c0_2] : memref<25x2xf32, #tpu.memory_space<vmem>>, vector<25x2xf32>
    %c0_3 = arith.constant 0 : index
    %c0_4 = arith.constant 0 : index
    %3 = vector.load %arg3[%c0_3, %c0_4] : memref<25x1xf32, #tpu.memory_space<vmem>>, vector<25x1xf32>
    %4 = vector.shape_cast %3 : vector<25x1xf32> to vector<25x1xf32>
    %5 = vector.broadcast %4 : vector<25x1xf32> to vector<25x128xf32>
    %6 = vector.extract_strided_slice %2 {offsets = [0, 0], sizes = [25, 1], strides = [1, 1]} : vector<25x2xf32> to vector<25x1xf32>
    %7 = vector.extract_strided_slice %1 {offsets = [0, 0], sizes = [1, 128], strides = [1, 1]} : vector<2x128xf32> to vector<1x128xf32>
    %8 = vector.broadcast %6 : vector<25x1xf32> to vector<25x128xf32>
    %9 = vector.broadcast %7 : vector<1x128xf32> to vector<25x128xf32>
    %10 = arith.mulf %8, %9 : vector<25x128xf32>
    %11 = arith.addf %5, %10 : vector<25x128xf32>
    %12 = vector.extract_strided_slice %2 {offsets = [0, 1], sizes = [25, 1], strides = [1, 1]} : vector<25x2xf32> to vector<25x1xf32>
    %13 = vector.extract_strided_slice %1 {offsets = [1, 0], sizes = [1, 128], strides = [1, 1]} : vector<2x128xf32> to vector<1x128xf32>
    %14 = vector.broadcast %12 : vector<25x1xf32> to vector<25x128xf32>
    %15 = vector.broadcast %13 : vector<1x128xf32> to vector<25x128xf32>
    %16 = arith.mulf %14, %15 : vector<25x128xf32>
    %17 = arith.addf %11, %16 : vector<25x128xf32>
    %c0_5 = arith.constant 0 : index
    %c0_6 = arith.constant 0 : index
    %18 = vector.load %arg4[%c0_5, %c0_6] : memref<2x25xf32, #tpu.memory_space<vmem>>, vector<2x25xf32>
    %19 = math.tanh %17 : vector<25x128xf32>
    %cst = arith.constant dense<0.000000e+00> : vector<2x128xf32>
    %20 = tpu.matmul %18, %19, %cst {dimension_numbers = #tpu.dot_dimension_numbers<[1], [0], [0], [1], [0, 0, 1, 1], [], []>} : vector<2x25xf32>, vector<25x128xf32>, vector<2x128xf32> -> vector<2x128xf32>
    %c0_7 = arith.constant 0 : index
    %c0_8 = arith.constant 0 : index
    %21 = vector.load %arg5[%c0_7, %c0_8] : memref<2x1xf32, #tpu.memory_space<vmem>>, vector<2x1xf32>
    %22 = vector.broadcast %21 : vector<2x1xf32> to vector<2x128xf32>
    %23 = arith.addf %20, %22 : vector<2x128xf32>
    %24 = arith.addf %0, %23 : vector<2x128xf32>
    %c0_9 = arith.constant 0 : index
    %c0_10 = arith.constant 0 : index
    %25 = vector.load %arg6[%c0_9, %c0_10] : memref<2x128xf32, #tpu.memory_space<vmem>>, vector<2x128xf32>
    tpu.vector_store %arg6[%c0_9, %c0_10], %24 {strides = array<i32>} : memref<2x128xf32, #tpu.memory_space<vmem>>, vector<2x128xf32>,
    return
  }
  func.func @transform_0(%arg0: i32) -> (i32, i32) {
    %c0_i32 = arith.constant 0 : i32
    %c0_i32_0 = arith.constant 0 : i32
    return %c0_i32, %arg0 : i32, i32
  }
  func.func @transform_1(%arg0: i32) -> (i32, i32) {
    %c0_i32 = arith.constant 0 : i32
    %c0_i32_0 = arith.constant 0 : i32
    %c0_i32_1 = arith.constant 0 : i32
    return %c0_i32, %c0_i32_0 : i32, i32
  }
  func.func @transform_2(%arg0: i32) -> (i32, i32) {
    %c0_i32 = arith.constant 0 : i32
    %c0_i32_0 = arith.constant 0 : i32
    %c0_i32_1 = arith.constant 0 : i32
    return %c0_i32, %c0_i32_0 : i32, i32
  }
  func.func @transform_3(%arg0: i32) -> (i32, i32) {
    %c0_i32 = arith.constant 0 : i32
    %c0_i32_0 = arith.constant 0 : i32
    %c0_i32_1 = arith.constant 0 : i32
    return %c0_i32, %c0_i32_0 : i32, i32
  }
  func.func @transform_4(%arg0: i32) -> (i32, i32) {
    %c0_i32 = arith.constant 0 : i32
    %c0_i32_0 = arith.constant 0 : i32
    %c0_i32_1 = arith.constant 0 : i32
    return %c0_i32, %c0_i32_0 : i32, i32
  }
  func.func @transform_5(%arg0: i32) -> (i32, i32) {
    %c0_i32 = arith.constant 0 : i32
    %c0_i32_0 = arith.constant 0 : i32
    return %c0_i32, %arg0 : i32, i32
  }
}

</mosaic_0001>

<llo_original>
// kernel: tpu_custom_call.1
$region0: #{tpu_custom_call.1}
  #allocation0 [shape = 'u32[]', space=smem, size = 0x4, offset = 0x4, fixed_abs, tag = 'smem constant byte address 0x4 - core index']
  #allocation1 [shape = 'u32[144,128]{1,0:T(1,128)}', space=vmem, size = 0x12000, scoped, tag = 'internal scratch']
  %s0 = inlined_call_operand.vmem [shape: f32[2,384], index: 0, kind: input, shape index: {}]
  %s1 = inlined_call_operand.vmem [shape: f32[25,2], index: 1, kind: input, shape index: {}]
  %s2 = inlined_call_operand.vmem [shape: f32[25,1], index: 2, kind: input, shape index: {}]
  %s3 = inlined_call_operand.vmem [shape: f32[2,25], index: 3, kind: input, shape index: {}]
  %s4 = inlined_call_operand.vmem [shape: f32[2,1], index: 4, kind: input, shape index: {}]
  %s5 = inlined_call_operand.hbm [shape: f32[2,384], index: 5, kind: output, shape index: {}]
  %s6 = sld [smem:[#allocation0]]
  $region53: #{tpu_custom_call.1} parent=0
    _
  %s8 = ssub.s32 1, %s6
  %s9 = scalar_select 0, %s8, %s6
  $region1: #{tpu_custom_call.1} parent=0
    #allocation2 [shape = 'u8[2048]{0}', space=vmem, size = 0x800, scoped, tag = 'output window, operand 0']
    #allocation3 [shape = 's32[2]{0}', space=sflag, size = 0x8, scoped, tag = 'scoped memory for tpu_custom_call.1']
    %10 = vsyncpa [#allocation3], 0
    %s11 = scalar_lea.sflag [#allocation3], 1
    %12 = vsyncpa %s11, 0
    loop: start=0, step=1, limit=5
    $region2: #{tpu_custom_call.1} parent=1 // loop_pre_header
      _
    $region3: #{tpu_custom_call.1} parent=1 // loop_header
      %s14 = sphi 0, %s18
      %p15 = scmp.ge.s32.totalorder %s14, 5
      %s24 = sphi 0, %s26
      %s27 = sphi 0, %s24
      %s28 = sphi 0, %s27
      %s44 = sphi 0, %s28
      %s48 = sphi 0, %s48
      %s50 = sphi 0, %s48
      %s51 = sphi 0, %s50
      %s65 = sphi 0, %s51
      %s69 = sphi 0, %s69
      %s71 = sphi 0, %s69
      %s72 = sphi 0, %s71
      %s86 = sphi 0, %s72
      %s90 = sphi 0, %s90
      %s92 = sphi 0, %s90
      %s93 = sphi 0, %s92
      %s107 = sphi 0, %s93
      %s111 = sphi 0, %s111
      %s113 = sphi 0, %s111
      %s114 = sphi 0, %s113
      %s128 = sphi 0, %s114
      %s134 = sphi 0, %s136
      %s137 = sphi 0, %s134
      %s138 = sphi 0, %s137
      %s154 = sphi 0, %s138
    $region4: #{tpu_custom_call.1} parent=1 // loop_header_branch
      %17 = sbr.rel (%p15) target = $region8
    $region5: #{tpu_custom_call.1} parent=1 // loop_body
      %s19 = ssub.s32 %s14, 1
      %s20 = ssub.s32 %s14, 2
      %s21 = sadd.s32 %s14, 1
      %s22 = ssub.s32 %s14, %s21
      %p23 = scmp.eq.s32.totalorder %s22, 0
      %s25 = sadd.s32 %s24, 1
      %s26 = scalar_select %p23, %s24, %s25
      %p29 = pneg %p23
      %p30 = scmp.eq.s32.totalorder %s14, 2
      %p31 = por %p29, %p30
      %p32 = scmp.ne.s32.totalorder %s24, %s27
      %p33 = scmp.eq.s32.totalorder %s14, 0
      %p34 = por %p32, %p33
      %p35 = scmp.ne.s32.totalorder %s24, %s27
      %p36 = scmp.eq.s32.totalorder %s19, 2
      %p37 = por %p35, %p36
      %p38 = scmp.ne.s32.totalorder %s27, %s28
      %p39 = scmp.eq.s32.totalorder %s19, 0
      %p40 = por %p38, %p39
      %p41 = scmp.ne.s32.totalorder %s27, %s28
      %p42 = scmp.eq.s32.totalorder %s20, 2
      %p43 = por %p41, %p42
      %p45 = scmp.ne.s32.totalorder %s28, %s44
      %p46 = scmp.eq.s32.totalorder %s20, 0
      %p47 = por %p45, %p46
      %s49 = sadd.s32 %s48, 1
      %p52 = scmp.eq.s32.totalorder %s14, 2
      %p53 = scmp.ne.s32.totalorder %s48, %s50
      %p54 = scmp.eq.s32.totalorder %s14, 0
      %p55 = por %p53, %p54
      %p56 = scmp.ne.s32.totalorder %s48, %s50
      %p57 = scmp.eq.s32.totalorder %s19, 2
      %p58 = por %p56, %p57
      %p59 = scmp.ne.s32.totalorder %s50, %s51
      %p60 = scmp.eq.s32.totalorder %s19, 0
      %p61 = por %p59, %p60
      %p62 = scmp.ne.s32.totalorder %s50, %s51
      %p63 = scmp.eq.s32.totalorder %s20, 2
      %p64 = por %p62, %p63
      %p66 = scmp.ne.s32.totalorder %s51, %s65
      %p67 = scmp.eq.s32.totalorder %s20, 0
      %p68 = por %p66, %p67
      %s70 = sadd.s32 %s69, 1
      %p73 = scmp.eq.s32.totalorder %s14, 2
      %p74 = scmp.ne.s32.totalorder %s69, %s71
      %p75 = scmp.eq.s32.totalorder %s14, 0
      %p76 = por %p74, %p75
      %p77 = scmp.ne.s32.totalorder %s69, %s71
      %p78 = scmp.eq.s32.totalorder %s19, 2
      %p79 = por %p77, %p78
      %p80 = scmp.ne.s32.totalorder %s71, %s72
      %p81 = scmp.eq.s32.totalorder %s19, 0
      %p82 = por %p80, %p81
      %p83 = scmp.ne.s32.totalorder %s71, %s72
      %p84 = scmp.eq.s32.totalorder %s20, 2
      %p85 = por %p83, %p84
      %p87 = scmp.ne.s32.totalorder %s72, %s86
      %p88 = scmp.eq.s32.totalorder %s20, 0
      %p89 = por %p87, %p88
      %s91 = sadd.s32 %s90, 1
      %p94 = scmp.eq.s32.totalorder %s14, 2
      %p95 = scmp.ne.s32.totalorder %s90, %s92
      %p96 = scmp.eq.s32.totalorder %s14, 0
      %p97 = por %p95, %p96
      %p98 = scmp.ne.s32.totalorder %s90, %s92
      %p99 = scmp.eq.s32.totalorder %s19, 2
      %p100 = por %p98, %p99
      %p101 = scmp.ne.s32.totalorder %s92, %s93
      %p102 = scmp.eq.s32.totalorder %s19, 0
      %p103 = por %p101, %p102
      %p104 = scmp.ne.s32.totalorder %s92, %s93
      %p105 = scmp.eq.s32.totalorder %s20, 2
      %p106 = por %p104, %p105
      %p108 = scmp.ne.s32.totalorder %s93, %s107
      %p109 = scmp.eq.s32.totalorder %s20, 0
      %p110 = por %p108, %p109
      %s112 = sadd.s32 %s111, 1
      %p115 = scmp.eq.s32.totalorder %s14, 2
      %p116 = scmp.ne.s32.totalorder %s111, %s113
      %p117 = scmp.eq.s32.totalorder %s14, 0
      %p118 = por %p116, %p117
      %p119 = scmp.ne.s32.totalorder %s111, %s113
      %p120 = scmp.eq.s32.totalorder %s19, 2
      %p121 = por %p119, %p120
      %p122 = scmp.ne.s32.totalorder %s113, %s114
      %p123 = scmp.eq.s32.totalorder %s19, 0
      %p124 = por %p122, %p123
      %p125 = scmp.ne.s32.totalorder %s113, %s114
      %p126 = scmp.eq.s32.totalorder %s20, 2
      %p127 = por %p125, %p126
      %p129 = scmp.ne.s32.totalorder %s114, %s128
      %p130 = scmp.eq.s32.totalorder %s20, 0
      %p131 = por %p129, %p130
      %s132 = ssub.s32 %s14, %s21
      %p133 = scmp.eq.s32.totalorder %s132, 0
      %s135 = sadd.s32 %s134, 1
      %s136 = scalar_select %p133, %s134, %s135
      %p139 = pneg %p133
      %p140 = scmp.eq.s32.totalorder %s14, 2
      %p141 = por %p139, %p140
      %p142 = scmp.ne.s32.totalorder %s134, %s137
      %p143 = scmp.eq.s32.totalorder %s14, 0
      %p144 = por %p142, %p143
      %p145 = scmp.ne.s32.totalorder %s134, %s137
      %p146 = scmp.eq.s32.totalorder %s19, 2
      %p147 = por %p145, %p146
      %p148 = scmp.ne.s32.totalorder %s137, %s138
      %p149 = scmp.eq.s32.totalorder %s19, 0
      %p150 = por %p148, %p149
      %p151 = scmp.ne.s32.totalorder %s137, %s138
      %p152 = scmp.eq.s32.totalorder %s20, 2
      %p153 = por %p151, %p152
      %p155 = scmp.ne.s32.totalorder %s138, %s154
      %p156 = scmp.eq.s32.totalorder %s20, 0
      %p157 = por %p155, %p156
      %p158 = scmp.le.s32.totalorder 1, %s14
      %p159 = scmp.lt.s32.totalorder %s14, 4
      %p160 = pnand %p158, %p159
      %p161 = pneg %p160
      // Predicated region
      $region9: #{tpu_custom_call.1} parent=5 // pred_check
        _
      $region10: #{tpu_custom_call.1} parent=5 // pred_check_branch
        %163 = sbr.rel (%p160) target = $region12
      $region11: #{tpu_custom_call.1} parent=5 // pred_region
        %s164 = ssub.s32 %s14, 1
        // Predicated region
        $region13: #{tpu_custom_call.1} parent=11 // pred_check
          %p165 = pneg %p61
        $region14: #{tpu_custom_call.1} parent=11 // pred_check_branch
          %167 = sbr.rel (%p165) target = $region16
        $region15: #{tpu_custom_call.1} parent=11 // pred_region
          _
        $region16: #{tpu_custom_call.1} parent=11 // pred_fallthru
          _
        // Predicated region
        $region17: #{tpu_custom_call.1} parent=11 // pred_check
          %p168 = pneg %p82
        $region18: #{tpu_custom_call.1} parent=11 // pred_check_branch
          %170 = sbr.rel (%p168) target = $region20
        $region19: #{tpu_custom_call.1} parent=11 // pred_region
          _
        $region20: #{tpu_custom_call.1} parent=11 // pred_fallthru
          _
        // Predicated region
        $region21: #{tpu_custom_call.1} parent=11 // pred_check
          %p171 = pneg %p103
        $region22: #{tpu_custom_call.1} parent=11 // pred_check_branch
          %173 = sbr.rel (%p171) target = $region24
        $region23: #{tpu_custom_call.1} parent=11 // pred_region
          _
        $region24: #{tpu_custom_call.1} parent=11 // pred_fallthru
          _
        // Predicated region
        $region25: #{tpu_custom_call.1} parent=11 // pred_check
          %p174 = pneg %p124
        $region26: #{tpu_custom_call.1} parent=11 // pred_check_branch
          %176 = sbr.rel (%p174) target = $region28
        $region27: #{tpu_custom_call.1} parent=11 // pred_region
          _
        $region28: #{tpu_custom_call.1} parent=11 // pred_fallthru
          _
      $region12: #{tpu_custom_call.1} parent=5 // pred_fallthru
        _
      %p177 = scmp.lt.s32.totalorder %s14, 3
      // Predicated region
      $region29: #{tpu_custom_call.1} parent=5 // pred_check
        %p178 = pneg %p177
      $region30: #{tpu_custom_call.1} parent=5 // pred_check_branch
        %180 = sbr.rel (%p178) target = $region32
      $region31: #{tpu_custom_call.1} parent=5 // pred_region
        // Predicated region
        $region33: #{tpu_custom_call.1} parent=31 // pred_check
          %p181 = pneg %p34
        $region34: #{tpu_custom_call.1} parent=31 // pred_check_branch
          %183 = sbr.rel (%p181) target = $region36
        $region35: #{tpu_custom_call.1} parent=31 // pred_region
          %p184 = scmp.lt.s32.totalorder %s14, 2
          %s185 = scalar_select %p184, %s14, 2
          %s186 = smul.addr %s185, 2
          %s187 = scalar_lea.vmem %s0, %s186
        $region36: #{tpu_custom_call.1} parent=31 // pred_fallthru
          _
      $region32: #{tpu_custom_call.1} parent=5 // pred_fallthru
        _
      %p188 = scmp.le.s32.totalorder 1, %s14
      %p189 = scmp.lt.s32.totalorder %s14, 4
      %p190 = pnand %p188, %p189
      %p191 = pneg %p190
      // Predicated region
      $region37: #{tpu_custom_call.1} parent=5 // pred_check
        _
      $region38: #{tpu_custom_call.1} parent=5 // pred_check_branch
        %193 = sbr.rel (%p190) target = $region40
      $region39: #{tpu_custom_call.1} parent=5 // pred_region
        %s194 = ssub.s32 %s14, 1
        %p195 = scmp.lt.s32.totalorder %s19, 2
        %s196 = scalar_select %p195, %s19, 2
        %s197 = smul.addr %s196, 2
        %s198 = scalar_lea.vmem %s0, %s197
        %p199 = pneg %p40
        %p200 = pneg %p37
        %p201 = pneg %p61
        %p202 = pneg %p58
        %p203 = pneg %p82
        %p204 = pneg %p79
        %p205 = pneg %p103
        %p206 = pneg %p100
        %p207 = pneg %p124
        %p208 = pneg %p121
        %p209 = pneg %p150
        %p210 = pneg %p147
        %s211 = sand.u32 %s137, 1
        %s212 = scalar_lea.sflag [#allocation3], %s211
        %s213 = sand.u32 %s137, 1
        %s214 = smul.addr %s213, 2
        %s215 = scalar_lea.vmem [#allocation2], %s214
        %p216 = scmp.lt.s32.totalorder %s19, 2
        %s217 = scalar_select %p216, %s19, 2
        %s218 = smul.addr %s217, 2
        %s219 = scalar_lea.vmem %s0, %s218
        %v220 = vld [vmem:[%s219] sm:$0x3]
        %v221 = vtanh.pop %v220
        %v222 = vld [vmem:[%s1] sm:$0xff]
        %v223 = vld [vmem:[%s1 + $0x8] sm:$0xff]
        %v224 = vld [vmem:[%s1 + $0x10] sm:$0xff]
        %v225 = vld [vmem:[%s1 + $0x18] sm:$0x1]
        %v226 = vld [vmem:[%s2] sm:$0xff]
        %v227 = vld [vmem:[%s2 + $0x8] sm:$0xff]
        %v228 = vld [vmem:[%s2 + $0x10] sm:$0xff]
        %v229 = vld [vmem:[%s2 + $0x18] sm:$0x1]
        %231 = vset.pattern.permute.xlu0 0
        %232 = vperm.xlu0 %231, %v226
        %v233 = vpop.permute.xlu0 %232
        %236 = vset.pattern.permute.xlu0 0
        %237 = vperm.xlu0 %236, %v227
        %v238 = vpop.permute.xlu0 %237
        %241 = vset.pattern.permute.xlu0 0
        %242 = vperm.xlu0 %241, %v228
        %v243 = vpop.permute.xlu0 %242
        %246 = vset.pattern.permute.xlu0 0
        %247 = vperm.xlu0 %246, %v229
        %v248 = vpop.permute.xlu0 %247
        %251 = vset.pattern.permute.xlu0 0
        %252 = vperm.xlu0 %251, %v222
        %v253 = vpop.permute.xlu0 %252
        %256 = vset.pattern.permute.xlu0 0
        %257 = vperm.xlu0 %256, %v223
        %v258 = vpop.permute.xlu0 %257
        %261 = vset.pattern.permute.xlu0 0
        %262 = vperm.xlu0 %261, %v224
        %v263 = vpop.permute.xlu0 %262
        %266 = vset.pattern.permute.xlu0 0
        %267 = vperm.xlu0 %266, %v225
        %v268 = vpop.permute.xlu0 %267
        %v270 = vlaneseq
        %v271 = vshrl.u32 %v270, 7
        %v272 = vsub.s32 0, %v271
        %v273 = vrot.slane %v221, %v272
        %v274 = vmul.f32 %v253, %v273
        %v275 = vmul.f32 %v258, %v273
        %v276 = vmul.f32 %v263, %v273
        %v277 = vmul.f32 %v268, %v273
        %v278 = vadd.f32 %v233, %v274
        %v279 = vadd.f32 %v238, %v275
        %v280 = vadd.f32 %v243, %v276
        %v281 = vadd.f32 %v248, %v277
        %282 = vset.pattern.permute.xlu0 1
        %283 = vperm.xlu0 %282, %v222
        %v284 = vpop.permute.xlu0 %283
        %286 = vset.pattern.permute.xlu0 1
        %287 = vperm.xlu0 %286, %v223
        %v288 = vpop.permute.xlu0 %287
        %290 = vset.pattern.permute.xlu0 1
        %291 = vperm.xlu0 %290, %v224
        %v292 = vpop.permute.xlu0 %291
        %294 = vset.pattern.permute.xlu0 1
        %295 = vperm.xlu0 %294, %v225
        %v296 = vpop.permute.xlu0 %295
        %v298 = vlaneseq
        %v299 = vshrl.u32 %v298, 7
        %v300 = vsub.s32 1, %v299
        %v301 = vrot.slane %v221, %v300
        %v302 = vmul.f32 %v284, %v301
        %v303 = vmul.f32 %v288, %v301
        %v304 = vmul.f32 %v292, %v301
        %v305 = vmul.f32 %v296, %v301
        %v306 = vadd.f32 %v278, %v302
        %v307 = vadd.f32 %v279, %v303
        %v308 = vadd.f32 %v280, %v304
        %v309 = vadd.f32 %v281, %v305
        %v310 = vld [vmem:[%s3] sm:$0x3]
        %v311 = vtanh.pop %v306
        %v312 = vtanh.pop %v307
        %v313 = vtanh.pop %v308
        %v314 = vtanh.pop %v309
        %v315 = vld [vmem:[%s4] sm:$0x3]
        %317 = vset.pattern.permute.xlu0 0
        %318 = vperm.xlu0 %317, %v315
        %v319 = vpop.permute.xlu0 %318
        %vm321 = vcmask 203776
        %v323 = vsel %vm321, %v310, 0
        %vm325 = vcmask 1040384
        %v327 = vsel %vm325, %v314, 0
        %329 = vmatprep.subr.mxu0 0.0
        %330 = vmatpush1.msra.mxu0 0.0
        %331 = vmatprep.subr.mxu0 0.0
        %332 = vmatpush1.msra.mxu0 0.0
        %333 = vmatprep.subr.mxu0 0.0
        %334 = vmatpush1.msra.mxu0 0.0
        %335 = vmatprep.subr.mxu0 0.0
        %336 = vmatpush1.msra.mxu0 0.0
        %337 = vmatprep.subr.mxu0 0.0
        %338 = vmatpush1.msra.mxu0 0.0
        %339 = vmatprep.subr.mxu0 0.0
        %340 = vmatpush1.msra.mxu0 0.0
        %341 = vmatprep.subr.mxu0 0.0
        %342 = vmatpush1.msra.mxu0 0.0
        %343 = vmatprep.subr.mxu0 0.0
        %344 = vmatpush1.msra.mxu0 0.0
        %345 = vmatprep.subr.mxu0 0.0
        %346 = vmatpush1.msra.mxu0 0.0
        %347 = vmatprep.subr.mxu0 0.0
        %348 = vmatpush1.msra.mxu0 0.0
        %349 = vmatprep.subr.mxu0 0.0
        %350 = vmatpush1.msra.mxu0 0.0
        %351 = vmatprep.subr.mxu0 0.0
        %352 = vmatpush1.msra.mxu0 0.0
        %353 = vmatprep.subr.mxu0 0.0
        %354 = vmatpush1.msra.mxu0 %v327
        %355 = vmatprep.subr.mxu0 0.0
        %356 = vmatpush1.msra.mxu0 %v313
        %357 = vmatprep.subr.mxu0 0.0
        %358 = vmatpush1.msra.mxu0 %v312
        %359 = vmatprep.subr.mxu0 0.0
        %360 = vmatpush1.msra.mxu0 %v311
        %361 = vmatprep.subr.mxu0 0.0
        %362 = vmatpush2.msra.mxu0 0.0
        %363 = vmatprep.subr.mxu0 0.0
        %364 = vmatpush2.msra.mxu0 0.0
        %365 = vmatprep.subr.mxu0 0.0
        %366 = vmatpush2.msra.mxu0 0.0
        %367 = vmatprep.subr.mxu0 0.0
        %368 = vmatpush2.msra.mxu0 0.0
        %369 = vmatprep.subr.mxu0 0.0
        %370 = vmatpush2.msra.mxu0 0.0
        %371 = vmatprep.subr.mxu0 0.0
        %372 = vmatpush2.msra.mxu0 0.0
        %373 = vmatprep.subr.mxu0 0.0
        %374 = vmatpush2.msra.mxu0 0.0
        %375 = vmatprep.subr.mxu0 0.0
        %376 = vmatpush2.msra.mxu0 0.0
        %377 = vmatprep.subr.mxu0 0.0
        %378 = vmatpush2.msra.mxu0 0.0
        %379 = vmatprep.subr.mxu0 0.0
        %380 = vmatpush2.msra.mxu0 0.0
        %381 = vmatprep.subr.mxu0 0.0
        %382 = vmatpush2.msra.mxu0 0.0
        %383 = vmatprep.subr.mxu0 0.0
        %384 = vmatpush2.msra.mxu0 0.0
        %385 = vmatprep.subr.mxu0 0.0
        %386 = vmatpush2.msra.mxu0 0.0
        %387 = vmatprep.subr.mxu0 0.0
        %388 = vmatpush2.msra.mxu0 0.0
        %389 = vmatprep.subr.mxu0 0.0
        %390 = vmatpush2.msra.mxu0 0.0
        %391 = vmatprep.subr.mxu0 0.0
        %392 = vmatpush2.msra.mxu0 0.0
        %393 = vmatprep.mubr.f32.mxu0 0.0
        %394 = vmatmul.mubr.f32.gmra.mxu0 %v323
        %v395 = vpop.f32.mrf.mxu0
        %v396 = vadd.f32 %v319, %v395
        %v397 = vpop.f32.mrf.mxu0
        %398 = vdwg.mxu0
        %v399 = vadd.f32 %v220, %v396
        %400 = vst [vmem:[%s215] sm:$0x3] %v399
        %s401 = sand.u32 %s137, 1
        %s402 = scalar_lea.sflag [#allocation3], %s401
        %s403 = sand.u32 %s137, 1
        %s404 = smul.addr %s403, 2
        %s405 = scalar_lea.vmem [#allocation2], %s404
        // Predicated region
        $region41: #{tpu_custom_call.1} parent=39 // pred_check
          %p406 = pneg %p147
        $region42: #{tpu_custom_call.1} parent=39 // pred_check_branch
          %408 = sbr.rel (%p406) target = $region44
        $region43: #{tpu_custom_call.1} parent=39 // pred_region
          %s410 = ssub.s32 32, 32
          %411 = vsyncadd %s402, %s410
          %s412 = smul.addr %s19, 32
          %s413 = scalar_lea.hbm %s5, %s412
          %s415 = sshll.u32 %s405, 4
          %s416 = int_to_ptr.vmem [resolvable:$true] %s415
          %418 = dma.vmem_to_hbm [thread:$0]  %s416, 32, %s413, %s402
        $region44: #{tpu_custom_call.1} parent=39 // pred_fallthru
          _
      $region40: #{tpu_custom_call.1} parent=5 // pred_fallthru
        _
      %p419 = scmp.le.s32.totalorder 2, %s14
      // Predicated region
      $region45: #{tpu_custom_call.1} parent=5 // pred_check
        %p420 = pneg %p419
      $region46: #{tpu_custom_call.1} parent=5 // pred_check_branch
        %422 = sbr.rel (%p420) target = $region48
      $region47: #{tpu_custom_call.1} parent=5 // pred_region
        %s423 = ssub.s32 %s14, 2
        // Predicated region
        $region49: #{tpu_custom_call.1} parent=47 // pred_check
          %p424 = pneg %p153
        $region50: #{tpu_custom_call.1} parent=47 // pred_check_branch
          %426 = sbr.rel (%p424) target = $region52
        $region51: #{tpu_custom_call.1} parent=47 // pred_region
          %s427 = sand.u32 %s138, 1
          %s428 = scalar_lea.sflag [#allocation3], %s427
          %s429 = sand.u32 %s138, 1
          %s430 = smul.addr %s429, 2
          %s431 = scalar_lea.vmem [#allocation2], %s430
          %432 = dma.done %s428, 32
        $region52: #{tpu_custom_call.1} parent=47 // pred_fallthru
          _
      $region48: #{tpu_custom_call.1} parent=5 // pred_fallthru
        _
    $region6: #{tpu_custom_call.1} parent=1 // loop_footer
      %s18 = sadd.s32 1, %s14
    $region7: #{tpu_custom_call.1} parent=1 // loop_footer_branch
      %13 = sbr.rel target = $region3
    $region8: #{tpu_custom_call.1} parent=1 // loop_exit
      _
    %433 = vsyncpa [#allocation3], 1
    %s434 = scalar_lea.sflag [#allocation3], 1
    %435 = vsyncpa %s434, 1

</llo_original>
